<compile_context>
chip_gen: v7x
topology: tpu7x:2x2x1
jax: 0.10.0
libtpu: 0.0.40
codegen_flags: <defaults>
</compile_context>

<pallas_src>
import jax
import jax.numpy as jnp
import numpy as np
from jax.experimental import pallas as pl
from jax.experimental.pallas import tpu as pltpu


# Row layout of the packed per-channel vector slab `vecs` (8, C):
#   0: bias1  (local_att1 conv1 bias folded through BN1), valid [:IC]
#   1: bias2  (local_att1 conv2 bias folded through BN2)
#   2: km1    kw[0] * bn_scale, with index 0 zeroed    (left  zero-pad)
#   3: k0     kw[1] * bn_scale
#   4: kp1    kw[2] * bn_scale, with index C-1 zeroed  (right zero-pad)
#   5: shb    bn shift
#   6: bf1    FC_Block fc1 bias, valid [:FC]
#   7: bf2    FC_Block fc2 bias


def msfrf_kernel(x_ref, r_ref,            # (TN, C) f32
                 w1_ref, w2_ref,          # (C, IC), (IC, C)  bf16 (BN folded)
                 wf1_ref, wf2_ref,        # (C, FC), (FC, C)  bf16
                 vec_ref,                 # (8, C) f32 packed vectors
                 o_ref):                  # (TN, C) f32
    IC = w1_ref.shape[1]
    FC = wf1_ref.shape[1]

    x = x_ref[...]
    r = r_ref[...]
    xa = x + r                                                  # (TN, C) f32
    C = xa.shape[-1]
    xab = xa.astype(jnp.bfloat16)

    vecs = vec_ref[...]
    b1 = vecs[0:1, 0:IC]
    b2 = vecs[1:2, :]
    km1 = vecs[2:3, :]
    k0 = vecs[3:4, :]
    kp1 = vecs[4:5, :]
    shb = vecs[5:6, :]
    bf1 = vecs[6:7, 0:FC]
    bf2 = vecs[7:8, :]

    # ---- local_att1: 1x1 conv -> BN -> ReLU -> 1x1 conv -> BN (BN folded) ----
    h = jnp.maximum(
        jnp.dot(xab, w1_ref[...], preferred_element_type=jnp.float32) + b1, 0.0)
    z1 = jnp.dot(h.astype(jnp.bfloat16), w2_ref[...],
                 preferred_element_type=jnp.float32) + b2

    # ---- ECA-style Conv1d(k=3, pad=1, bias=False) along channels, then BN ----
    # BN scale folded into taps; zero-padding folded into km1[0]/kp1[C-1] = 0.
    z2 = (km1 * pltpu.roll(xa, shift=1, axis=1)          # xa[c-1]
          + k0 * xa
          + kp1 * pltpu.roll(xa, shift=C - 1, axis=1)    # xa[c+1]
          + shb)

    # ---- attention2 = FC_Block(channels, 16): pointwise channel MLP ----
    xlg = (z1 + z2).astype(jnp.bfloat16)
    a = jnp.maximum(
        jnp.dot(xlg, wf1_ref[...], preferred_element_type=jnp.float32) + bf1, 0.0)
    g = jnp.dot(a.astype(jnp.bfloat16), wf2_ref[...],
                preferred_element_type=jnp.float32) + bf2
    wei = jax.nn.sigmoid(g)

    # 2*x*wei + 2*r*(1-wei) == 2*(r + (x-r)*wei)
    o_ref[...] = 2.0 * (r + (x - r) * wei)


def make_params(key, channels=128, r=4, fc_r=16, eps=1e-5):
    """Deterministic synthetic parameters, with BN folded into weights/biases."""
    C, IC, FC = channels, channels // r, channels // fc_r
    ks = list(jax.random.split(key, 24))

    def bn_fold(kg, kb, km, kv, n):
        gamma = jax.random.uniform(kg, (n,), minval=0.5, maxval=1.5)
        beta = jax.random.normal(kb, (n,)) * 0.1
        mean = jax.random.normal(km, (n,)) * 0.1
        var = jax.random.uniform(kv, (n,), minval=0.5, maxval=1.5)
        scale = gamma / jnp.sqrt(var + eps)
        shift = beta - mean * scale
        return scale.astype(jnp.float32), shift.astype(jnp.float32)

    # local_att1: Conv2d(C, IC, 1) -> BN(IC) -> ReLU -> Conv2d(IC, C, 1) -> BN(C)
    w1 = jax.random.normal(ks[0], (IC, C)) / np.sqrt(C)
    b1 = jax.random.normal(ks[1], (IC,)) * 0.1
    sc1, sh1 = bn_fold(ks[2], ks[3], ks[4], ks[5], IC)
    w1t = w1.T * sc1[None, :]                     # (C, IC), BN scale folded in
    bias1 = sh1 + b1 * sc1

    w2 = jax.random.normal(ks[6], (C, IC)) / np.sqrt(IC)
    b2 = jax.random.normal(ks[7], (C,)) * 0.1
    sc2, sh2 = bn_fold(ks[8], ks[9], ks[10], ks[11], C)
    w2t = w2.T * sc2[None, :]                     # (IC, C)
    bias2 = sh2 + b2 * sc2

    # self.conv: Conv1d(1, 1, 3, padding=1, bias=False); self.bn: BatchNorm2d(C)
    kw = (jax.random.normal(ks[12], (3,)) * 0.5).astype(jnp.float32)
    scb, shb = bn_fold(ks[13], ks[14], ks[15], ks[16], C)
    km1 = (kw[0] * scb).at[0].set(0.0)            # zero-pad at c == 0
    k0 = kw[1] * scb
    kp1 = (kw[2] * scb).at[C - 1].set(0.0)        # zero-pad at c == C-1

    # attention2 = FC_Block(C, 16): 1x1 conv C->FC, ReLU, 1x1 conv FC->C
    wf1 = jax.random.normal(ks[17], (FC, C)) / np.sqrt(C)
    bf1 = jax.random.normal(ks[18], (FC,)) * 0.1
    wf2 = jax.random.normal(ks[19], (C, FC)) / np.sqrt(FC)
    bf2 = jax.random.normal(ks[20], (C,)) * 0.1

    def pad_c(v):
        v = jnp.asarray(v, jnp.float32)
        return jnp.pad(v, (0, C - v.shape[0]))

    vecs = jnp.stack([pad_c(bias1), pad_c(bias2), km1, k0, kp1, shb,
                      pad_c(bf1), pad_c(bf2)], axis=0).astype(jnp.float32)

    bf16 = lambda a: jnp.asarray(a, jnp.bfloat16)
    return dict(w1t=bf16(w1t), w2t=bf16(w2t),
                wf1t=bf16(wf1.T), wf2t=bf16(wf2.T),
                vecs=vecs)


def _round_up(a, b):
    return (a + b - 1) // b * b


def msfrf_forward(x, residual, p, *, tn=512):
    """x, residual: (N, C, 1, 1) float32 (NCHW).  Returns (N, C, 1, 1) f32."""
    N, C, H, W = x.shape
    assert H == 1 and W == 1, "MSFRF forward requires H == W == 1"
    x2 = x.reshape(N, C).astype(jnp.float32)
    r2 = residual.reshape(N, C).astype(jnp.float32)

    IC = p["w1t"].shape[1]
    FC = p["wf1t"].shape[1]

    # Pick a large, lane-dense batch tile; keep >= 2 grid steps when the batch
    # allows it (v7x has 2 TensorCores). Tail handled by zero padding.
    half = _round_up(pl.cdiv(N, 2), 8)
    tn_eff = max(8, min(tn, half))
    grid_n = pl.cdiv(N, tn_eff)
    Np = grid_n * tn_eff
    if Np != N:
        pad = Np - N
        x2 = jnp.pad(x2, ((0, pad), (0, 0)))
        r2 = jnp.pad(r2, ((0, pad), (0, 0)))

    tile = lambda i: (i, 0)
    full = lambda i: (0, 0)
    grid_spec = pltpu.PrefetchScalarGridSpec(
        num_scalar_prefetch=0,
        grid=(grid_n,),
        in_specs=[
            pl.BlockSpec((tn_eff, C), tile),       # x
            pl.BlockSpec((tn_eff, C), tile),       # residual
            pl.BlockSpec((C, IC), full),           # w1t (bf16, BN folded)
            pl.BlockSpec((IC, C), full),           # w2t (bf16, BN folded)
            pl.BlockSpec((C, FC), full),           # wf1t (bf16)
            pl.BlockSpec((FC, C), full),           # wf2t (bf16)
            pl.BlockSpec((8, C), full),            # packed per-channel vectors
        ],
        out_specs=pl.BlockSpec((tn_eff, C), tile),
    )

    out = pl.pallas_call(
        msfrf_kernel,
        out_shape=jax.ShapeDtypeStruct((Np, C), jnp.float32),
        grid_spec=grid_spec,
        compiler_params=pltpu.CompilerParams(
            dimension_semantics=("parallel",),
            vmem_limit_bytes=32 * 1024 * 1024),
    )(x2, r2, p["w1t"], p["w2t"], p["wf1t"], p["wf2t"], p["vecs"])

    return out[:N].reshape(N, C, 1, 1)


def msfrf_reference(x, residual, p):
    """Pure-JAX reference of the same (BN-folded, bf16-weight) math."""
    N, C, _, _ = x.shape
    x2 = x.reshape(N, C).astype(jnp.float32)
    r2 = residual.reshape(N, C).astype(jnp.float32)
    xa = x2 + r2
    xab = xa.astype(jnp.bfloat16)

    IC = p["w1t"].shape[1]
    FC = p["wf1t"].shape[1]
    vecs = p["vecs"]
    b1, b2 = vecs[0:1, :IC], vecs[1:2, :]
    km1, k0, kp1, shb = vecs[2:3, :], vecs[3:4, :], vecs[4:5, :], vecs[5:6, :]
    bf1, bf2 = vecs[6:7, :FC], vecs[7:8, :]

    h = jnp.maximum(
        jnp.dot(xab, p["w1t"], preferred_element_type=jnp.float32) + b1, 0.0)
    z1 = jnp.dot(h.astype(jnp.bfloat16), p["w2t"],
                 preferred_element_type=jnp.float32) + b2

    xm1 = jnp.pad(xa, ((0, 0), (1, 0)))[:, :-1]
    xp1 = jnp.pad(xa, ((0, 0), (0, 1)))[:, 1:]
    z2 = km1 * xm1 + k0 * xa + kp1 * xp1 + shb

    xlg = (z1 + z2).astype(jnp.bfloat16)
    a = jnp.maximum(
        jnp.dot(xlg, p["wf1t"], preferred_element_type=jnp.float32) + bf1, 0.0)
    wei = jax.nn.sigmoid(
        jnp.dot(a.astype(jnp.bfloat16), p["wf2t"],
                preferred_element_type=jnp.float32) + bf2)
    xo = 2.0 * (r2 + (x2 - r2) * wei)
    return xo.reshape(N, C, 1, 1)


if __name__ == "__main__":
    N, C = 64, 128                      # module default channels=128, r=4
    key = jax.random.PRNGKey(0)
    kx, kr, kp = jax.random.split(key, 3)
    x = jax.random.normal(kx, (N, C, 1, 1), dtype=jnp.float32)
    residual = jax.random.normal(kr, (N, C, 1, 1), dtype=jnp.float32)
    params = make_params(kp, channels=C, r=4, fc_r=16)

    out = jax.block_until_ready(msfrf_forward(x, residual, params))
    ref = jax.block_until_ready(msfrf_reference(x, residual, params))

    assert out.shape == (N, C, 1, 1)
    assert np.allclose(np.asarray(out), np.asarray(ref), rtol=1e-2, atol=1e-2), (
        "Pallas kernel mismatch vs pure-JAX reference")
    print("KERNEL_OK")
</pallas_src>

<mosaic_0001>
module attributes {stable_mosaic.version = 11 : i64} {
  func.func @msfrf_kernel(%arg0: i32, %arg1: memref<32x128xf32, #tpu.memory_space<vmem>>, %arg2: memref<32x128xf32, #tpu.memory_space<vmem>>, %arg3: memref<128x32xbf16, #tpu.memory_space<vmem>>, %arg4: memref<32x128xbf16, #tpu.memory_space<vmem>>, %arg5: memref<128x8xbf16, #tpu.memory_space<vmem>>, %arg6: memref<8x128xbf16, #tpu.memory_space<vmem>>, %arg7: memref<8x128xf32, #tpu.memory_space<vmem>>, %arg8: memref<32x128xf32, #tpu.memory_space<vmem>>) attributes {dimension_semantics = [#tpu.dimension_semantics<parallel>], iteration_bounds = array<i64: 2>, scalar_prefetch = 0 : i64, scratch_operands = 0 : i64, tpu.core_type = #tpu.core_type<tc>, window_params = [{transform_indices = @transform_0, window_bounds = array<i64: 32, 128>}, {transform_indices = @transform_1, window_bounds = array<i64: 32, 128>}, {pipeline_mode = #tpu.pipeline_mode<synchronous>, transform_indices = @transform_2, window_bounds = array<i64: 128, 32>}, {pipeline_mode = #tpu.pipeline_mode<synchronous>, transform_indices = @transform_3, window_bounds = array<i64: 32, 128>}, {pipeline_mode = #tpu.pipeline_mode<synchronous>, transform_indices = @transform_4, window_bounds = array<i64: 128, 8>}, {pipeline_mode = #tpu.pipeline_mode<synchronous>, transform_indices = @transform_5, window_bounds = array<i64: 8, 128>}, {pipeline_mode = #tpu.pipeline_mode<synchronous>, transform_indices = @transform_6, window_bounds = array<i64: 8, 128>}, {transform_indices = @transform_7, window_bounds = array<i64: 32, 128>}]} {
    %c0 = arith.constant 0 : index
    %c0_0 = arith.constant 0 : index
    %0 = vector.load %arg1[%c0, %c0_0] : memref<32x128xf32, #tpu.memory_space<vmem>>, vector<32x128xf32>
    %c0_1 = arith.constant 0 : index
    %c0_2 = arith.constant 0 : index
    %1 = vector.load %arg2[%c0_1, %c0_2] : memref<32x128xf32, #tpu.memory_space<vmem>>, vector<32x128xf32>
    %2 = arith.addf %0, %1 : vector<32x128xf32>
    %3 = arith.truncf %2 : vector<32x128xf32> to vector<32x128xbf16>
    %c0_3 = arith.constant 0 : index
    %c0_4 = arith.constant 0 : index
    %4 = vector.load %arg7[%c0_3, %c0_4] : memref<8x128xf32, #tpu.memory_space<vmem>>, vector<8x128xf32>
    %5 = vector.extract_strided_slice %4 {offsets = [0, 0], sizes = [1, 32], strides = [1, 1]} : vector<8x128xf32> to vector<1x32xf32>
    %6 = vector.extract_strided_slice %4 {offsets = [1, 0], sizes = [1, 128], strides = [1, 1]} : vector<8x128xf32> to vector<1x128xf32>
    %7 = vector.extract_strided_slice %4 {offsets = [2, 0], sizes = [1, 128], strides = [1, 1]} : vector<8x128xf32> to vector<1x128xf32>
    %8 = vector.extract_strided_slice %4 {offsets = [3, 0], sizes = [1, 128], strides = [1, 1]} : vector<8x128xf32> to vector<1x128xf32>
    %9 = vector.extract_strided_slice %4 {offsets = [4, 0], sizes = [1, 128], strides = [1, 1]} : vector<8x128xf32> to vector<1x128xf32>
    %10 = vector.extract_strided_slice %4 {offsets = [5, 0], sizes = [1, 128], strides = [1, 1]} : vector<8x128xf32> to vector<1x128xf32>
    %11 = vector.extract_strided_slice %4 {offsets = [6, 0], sizes = [1, 8], strides = [1, 1]} : vector<8x128xf32> to vector<1x8xf32>
    %12 = vector.extract_strided_slice %4 {offsets = [7, 0], sizes = [1, 128], strides = [1, 1]} : vector<8x128xf32> to vector<1x128xf32>
    %c0_5 = arith.constant 0 : index
    %c0_6 = arith.constant 0 : index
    %13 = vector.load %arg3[%c0_5, %c0_6] : memref<128x32xbf16, #tpu.memory_space<vmem>>, vector<128x32xbf16>
    %cst = arith.constant dense<0.000000e+00> : vector<32x32xf32>
    %14 = tpu.matmul %3, %13, %cst {dimension_numbers = #tpu.dot_dimension_numbers<[1], [0], [0], [1], [0, 0, 1, 1], [], []>} : vector<32x128xbf16>, vector<128x32xbf16>, vector<32x32xf32> -> vector<32x32xf32>
    %15 = vector.broadcast %5 : vector<1x32xf32> to vector<32x32xf32>
    %16 = arith.addf %14, %15 : vector<32x32xf32>
    %cst_7 = arith.constant 0.000000e+00 : f32
    %17 = vector.broadcast %cst_7 : f32 to vector<32x32xf32>
    %18 = arith.maximumf %16, %17 : vector<32x32xf32>
    %19 = arith.truncf %18 : vector<32x32xf32> to vector<32x32xbf16>
    %c0_8 = arith.constant 0 : index
    %c0_9 = arith.constant 0 : index
    %20 = vector.load %arg4[%c0_8, %c0_9] : memref<32x128xbf16, #tpu.memory_space<vmem>>, vector<32x128xbf16>
    %cst_10 = arith.constant dense<0.000000e+00> : vector<32x128xf32>
    %21 = tpu.matmul %19, %20, %cst_10 {dimension_numbers = #tpu.dot_dimension_numbers<[1], [0], [0], [1], [0, 0, 1, 1], [], []>} : vector<32x32xbf16>, vector<32x128xbf16>, vector<32x128xf32> -> vector<32x128xf32>
    %22 = vector.broadcast %6 : vector<1x128xf32> to vector<32x128xf32>
    %23 = arith.addf %21, %22 : vector<32x128xf32>
    %c1_i32 = arith.constant 1 : i32
    %24 = tpu.dynamic_rotate %2 by %c1_i32 dim 1 : vector<32x128xf32>, i32 -> vector<32x128xf32>
    %25 = vector.broadcast %7 : vector<1x128xf32> to vector<32x128xf32>
    %26 = arith.mulf %25, %24 : vector<32x128xf32>
    %27 = vector.broadcast %8 : vector<1x128xf32> to vector<32x128xf32>
    %28 = arith.mulf %27, %2 : vector<32x128xf32>
    %29 = arith.addf %26, %28 : vector<32x128xf32>
    %c127_i32 = arith.constant 127 : i32
    %30 = tpu.dynamic_rotate %2 by %c127_i32 dim 1 : vector<32x128xf32>, i32 -> vector<32x128xf32>
    %31 = vector.broadcast %9 : vector<1x128xf32> to vector<32x128xf32>
    %32 = arith.mulf %31, %30 : vector<32x128xf32>
    %33 = arith.addf %29, %32 : vector<32x128xf32>
    %34 = vector.broadcast %10 : vector<1x128xf32> to vector<32x128xf32>
    %35 = arith.addf %33, %34 : vector<32x128xf32>
    %36 = arith.addf %23, %35 : vector<32x128xf32>
    %37 = arith.truncf %36 : vector<32x128xf32> to vector<32x128xbf16>
    %c0_11 = arith.constant 0 : index
    %c0_12 = arith.constant 0 : index
    %38 = vector.load %arg5[%c0_11, %c0_12] : memref<128x8xbf16, #tpu.memory_space<vmem>>, vector<128x8xbf16>
    %cst_13 = arith.constant dense<0.000000e+00> : vector<32x8xf32>
    %39 = tpu.matmul %37, %38, %cst_13 {dimension_numbers = #tpu.dot_dimension_numbers<[1], [0], [0], [1], [0, 0, 1, 1], [], []>} : vector<32x128xbf16>, vector<128x8xbf16>, vector<32x8xf32> -> vector<32x8xf32>
    %40 = vector.broadcast %11 : vector<1x8xf32> to vector<32x8xf32>
    %41 = arith.addf %39, %40 : vector<32x8xf32>
    %cst_14 = arith.constant 0.000000e+00 : f32
    %42 = vector.broadcast %cst_14 : f32 to vector<32x8xf32>
    %43 = arith.maximumf %41, %42 : vector<32x8xf32>
    %44 = arith.truncf %43 : vector<32x8xf32> to vector<32x8xbf16>
    %c0_15 = arith.constant 0 : index
    %c0_16 = arith.constant 0 : index
    %45 = vector.load %arg6[%c0_15, %c0_16] : memref<8x128xbf16, #tpu.memory_space<vmem>>, vector<8x128xbf16>
    %cst_17 = arith.constant dense<0.000000e+00> : vector<32x128xf32>
    %46 = tpu.matmul %44, %45, %cst_17 {dimension_numbers = #tpu.dot_dimension_numbers<[1], [0], [0], [1], [0, 0, 1, 1], [], []>} : vector<32x8xbf16>, vector<8x128xbf16>, vector<32x128xf32> -> vector<32x128xf32>
    %47 = vector.broadcast %12 : vector<1x128xf32> to vector<32x128xf32>
    %48 = arith.addf %46, %47 : vector<32x128xf32>
    %49 = arith.negf %48 : vector<32x128xf32>
    %50 = math.exp %49 : vector<32x128xf32>
    %cst_18 = arith.constant 1.000000e+00 : f32
    %51 = vector.broadcast %cst_18 : f32 to vector<32x128xf32>
    %52 = arith.addf %51, %50 : vector<32x128xf32>
    %53 = arith.divf %51, %52 : vector<32x128xf32>
    %54 = arith.subf %0, %1 : vector<32x128xf32>
    %55 = arith.mulf %54, %53 : vector<32x128xf32>
    %56 = arith.addf %1, %55 : vector<32x128xf32>
    %cst_19 = arith.constant 2.000000e+00 : f32
    %57 = vector.broadcast %cst_19 : f32 to vector<32x128xf32>
    %58 = arith.mulf %57, %56 : vector<32x128xf32>
    %c0_20 = arith.constant 0 : index
    %c0_21 = arith.constant 0 : index
    %59 = vector.load %arg8[%c0_20, %c0_21] : memref<32x128xf32, #tpu.memory_space<vmem>>, vector<32x128xf32>
    tpu.vector_store %arg8[%c0_20, %c0_21], %58 {strides = array<i32>} : memref<32x128xf32, #tpu.memory_space<vmem>>, vector<32x128xf32>,
    return
  }
  func.func @transform_0(%arg0: i32) -> (i32, i32) {
    %c0_i32 = arith.constant 0 : i32
    %c0_i32_0 = arith.constant 0 : i32
    return %arg0, %c0_i32 : i32, i32
  }
  func.func @transform_1(%arg0: i32) -> (i32, i32) {
    %c0_i32 = arith.constant 0 : i32
    %c0_i32_0 = arith.constant 0 : i32
    return %arg0, %c0_i32 : i32, i32
  }
  func.func @transform_2(%arg0: i32) -> (i32, i32) {
    %c0_i32 = arith.constant 0 : i32
    %c0_i32_0 = arith.constant 0 : i32
    %c0_i32_1 = arith.constant 0 : i32
    return %c0_i32, %c0_i32_0 : i32, i32
  }
  func.func @transform_3(%arg0: i32) -> (i32, i32) {
    %c0_i32 = arith.constant 0 : i32
    %c0_i32_0 = arith.constant 0 : i32
    %c0_i32_1 = arith.constant 0 : i32
    return %c0_i32, %c0_i32_0 : i32, i32
  }
  func.func @transform_4(%arg0: i32) -> (i32, i32) {
    %c0_i32 = arith.constant 0 : i32
    %c0_i32_0 = arith.constant 0 : i32
    %c0_i32_1 = arith.constant 0 : i32
    return %c0_i32, %c0_i32_0 : i32, i32
  }
  func.func @transform_5(%arg0: i32) -> (i32, i32) {
    %c0_i32 = arith.constant 0 : i32
    %c0_i32_0 = arith.constant 0 : i32
    %c0_i32_1 = arith.constant 0 : i32
    return %c0_i32, %c0_i32_0 : i32, i32
  }
  func.func @transform_6(%arg0: i32) -> (i32, i32) {
    %c0_i32 = arith.constant 0 : i32
    %c0_i32_0 = arith.constant 0 : i32
    %c0_i32_1 = arith.constant 0 : i32
    return %c0_i32, %c0_i32_0 : i32, i32
  }
  func.func @transform_7(%arg0: i32) -> (i32, i32) {
    %c0_i32 = arith.constant 0 : i32
    %c0_i32_0 = arith.constant 0 : i32
    return %arg0, %c0_i32 : i32, i32
  }
}

</mosaic_0001>

<llo_original>
// kernel: tpu_custom_call.1
$region0: #{tpu_custom_call.1}
  #allocation0 [shape = 'u32[]', space=smem, size = 0x4, offset = 0x4, fixed_abs, tag = 'smem constant byte address 0x4 - core index']
  #allocation1 [shape = 'u32[144,128]{1,0:T(1,128)}', space=vmem, size = 0x12000, scoped, tag = 'internal scratch']
  %s0 = inlined_call_operand.vmem [shape: f32[64,128], index: 0, kind: input, shape index: {}]
  %s1 = inlined_call_operand.vmem [shape: f32[64,128], index: 1, kind: input, shape index: {}]
  %s2 = inlined_call_operand.vmem [shape: bf16[128,32], index: 2, kind: input, shape index: {}]
  %s3 = inlined_call_operand.vmem [shape: bf16[32,128], index: 3, kind: input, shape index: {}]
  %s4 = inlined_call_operand.vmem [shape: bf16[128,8], index: 4, kind: input, shape index: {}]
  %s5 = inlined_call_operand.vmem [shape: bf16[8,128], index: 5, kind: input, shape index: {}]
  %s6 = inlined_call_operand.vmem [shape: f32[8,128], index: 6, kind: input, shape index: {}]
  %s7 = inlined_call_operand.hbm [shape: f32[64,128], index: 7, kind: output, shape index: {}]
  %s8 = sld [smem:[#allocation0]]
  $region61: #{tpu_custom_call.1} parent=0
    _
  %s10 = ssub.s32 1, %s8
  %s11 = scalar_select 0, %s10, %s8
  $region1: #{tpu_custom_call.1} parent=0
    #allocation2 [shape = 'u8[32768]{0}', space=vmem, size = 0x8000, scoped, tag = 'output window, operand 0']
    #allocation3 [shape = 's32[2]{0}', space=sflag, size = 0x8, scoped, tag = 'scoped memory for tpu_custom_call.1']
    %12 = vsyncpa [#allocation3], 0
    %s13 = scalar_lea.sflag [#allocation3], 1
    %14 = vsyncpa %s13, 0
    loop: start=0, step=1, limit=4
    $region2: #{tpu_custom_call.1} parent=1 // loop_pre_header
      _
    $region3: #{tpu_custom_call.1} parent=1 // loop_header
      %s16 = sphi 0, %s20
      %p17 = scmp.ge.s32.totalorder %s16, 4
      %s26 = sphi 0, %s28
      %s29 = sphi 0, %s26
      %s30 = sphi 0, %s29
      %s46 = sphi 0, %s30
      %s52 = sphi 0, %s54
      %s55 = sphi 0, %s52
      %s56 = sphi 0, %s55
      %s72 = sphi 0, %s56
      %s76 = sphi 0, %s76
      %s78 = sphi 0, %s76
      %s79 = sphi 0, %s78
      %s93 = sphi 0, %s79
      %s97 = sphi 0, %s97
      %s99 = sphi 0, %s97
      %s100 = sphi 0, %s99
      %s114 = sphi 0, %s100
      %s118 = sphi 0, %s118
      %s120 = sphi 0, %s118
      %s121 = sphi 0, %s120
      %s135 = sphi 0, %s121
      %s139 = sphi 0, %s139
      %s141 = sphi 0, %s139
      %s142 = sphi 0, %s141
      %s156 = sphi 0, %s142
      %s160 = sphi 0, %s160
      %s162 = sphi 0, %s160
      %s163 = sphi 0, %s162
      %s177 = sphi 0, %s163
      %s183 = sphi 0, %s185
      %s186 = sphi 0, %s183
      %s187 = sphi 0, %s186
      %s203 = sphi 0, %s187
    $region4: #{tpu_custom_call.1} parent=1 // loop_header_branch
      %19 = sbr.rel (%p17) target = $region8
    $region5: #{tpu_custom_call.1} parent=1 // loop_body
      %s21 = ssub.s32 %s16, 1
      %s22 = ssub.s32 %s16, 2
      %s23 = sadd.s32 %s16, 1
      %s24 = ssub.s32 %s16, %s23
      %p25 = scmp.eq.s32.totalorder %s24, 0
      %s27 = sadd.s32 %s26, 1
      %s28 = scalar_select %p25, %s26, %s27
      %p31 = pneg %p25
      %p32 = scmp.eq.s32.totalorder %s16, 1
      %p33 = por %p31, %p32
      %p34 = scmp.ne.s32.totalorder %s26, %s29
      %p35 = scmp.eq.s32.totalorder %s16, 0
      %p36 = por %p34, %p35
      %p37 = scmp.ne.s32.totalorder %s26, %s29
      %p38 = scmp.eq.s32.totalorder %s21, 1
      %p39 = por %p37, %p38
      %p40 = scmp.ne.s32.totalorder %s29, %s30
      %p41 = scmp.eq.s32.totalorder %s21, 0
      %p42 = por %p40, %p41
      %p43 = scmp.ne.s32.totalorder %s29, %s30
      %p44 = scmp.eq.s32.totalorder %s22, 1
      %p45 = por %p43, %p44
      %p47 = scmp.ne.s32.totalorder %s30, %s46
      %p48 = scmp.eq.s32.totalorder %s22, 0
      %p49 = por %p47, %p48
      %s50 = ssub.s32 %s16, %s23
      %p51 = scmp.eq.s32.totalorder %s50, 0
      %s53 = sadd.s32 %s52, 1
      %s54 = scalar_select %p51, %s52, %s53
      %p57 = pneg %p51
      %p58 = scmp.eq.s32.totalorder %s16, 1
      %p59 = por %p57, %p58
      %p60 = scmp.ne.s32.totalorder %s52, %s55
      %p61 = scmp.eq.s32.totalorder %s16, 0
      %p62 = por %p60, %p61
      %p63 = scmp.ne.s32.totalorder %s52, %s55
      %p64 = scmp.eq.s32.totalorder %s21, 1
      %p65 = por %p63, %p64
      %p66 = scmp.ne.s32.totalorder %s55, %s56
      %p67 = scmp.eq.s32.totalorder %s21, 0
      %p68 = por %p66, %p67
      %p69 = scmp.ne.s32.totalorder %s55, %s56
      %p70 = scmp.eq.s32.totalorder %s22, 1
      %p71 = por %p69, %p70
      %p73 = scmp.ne.s32.totalorder %s56, %s72
      %p74 = scmp.eq.s32.totalorder %s22, 0
      %p75 = por %p73, %p74
      %s77 = sadd.s32 %s76, 1
      %p80 = scmp.eq.s32.totalorder %s16, 1
      %p81 = scmp.ne.s32.totalorder %s76, %s78
      %p82 = scmp.eq.s32.totalorder %s16, 0
      %p83 = por %p81, %p82
      %p84 = scmp.ne.s32.totalorder %s76, %s78
      %p85 = scmp.eq.s32.totalorder %s21, 1
      %p86 = por %p84, %p85
      %p87 = scmp.ne.s32.totalorder %s78, %s79
      %p88 = scmp.eq.s32.totalorder %s21, 0
      %p89 = por %p87, %p88
      %p90 = scmp.ne.s32.totalorder %s78, %s79
      %p91 = scmp.eq.s32.totalorder %s22, 1
      %p92 = por %p90, %p91
      %p94 = scmp.ne.s32.totalorder %s79, %s93
      %p95 = scmp.eq.s32.totalorder %s22, 0
      %p96 = por %p94, %p95
      %s98 = sadd.s32 %s97, 1
      %p101 = scmp.eq.s32.totalorder %s16, 1
      %p102 = scmp.ne.s32.totalorder %s97, %s99
      %p103 = scmp.eq.s32.totalorder %s16, 0
      %p104 = por %p102, %p103
      %p105 = scmp.ne.s32.totalorder %s97, %s99
      %p106 = scmp.eq.s32.totalorder %s21, 1
      %p107 = por %p105, %p106
      %p108 = scmp.ne.s32.totalorder %s99, %s100
      %p109 = scmp.eq.s32.totalorder %s21, 0
      %p110 = por %p108, %p109
      %p111 = scmp.ne.s32.totalorder %s99, %s100
      %p112 = scmp.eq.s32.totalorder %s22, 1
      %p113 = por %p111, %p112
      %p115 = scmp.ne.s32.totalorder %s100, %s114
      %p116 = scmp.eq.s32.totalorder %s22, 0
      %p117 = por %p115, %p116
      %s119 = sadd.s32 %s118, 1
      %p122 = scmp.eq.s32.totalorder %s16, 1
      %p123 = scmp.ne.s32.totalorder %s118, %s120
      %p124 = scmp.eq.s32.totalorder %s16, 0
      %p125 = por %p123, %p124
      %p126 = scmp.ne.s32.totalorder %s118, %s120
      %p127 = scmp.eq.s32.totalorder %s21, 1
      %p128 = por %p126, %p127
      %p129 = scmp.ne.s32.totalorder %s120, %s121
      %p130 = scmp.eq.s32.totalorder %s21, 0
      %p131 = por %p129, %p130
      %p132 = scmp.ne.s32.totalorder %s120, %s121
      %p133 = scmp.eq.s32.totalorder %s22, 1
      %p134 = por %p132, %p133
      %p136 = scmp.ne.s32.totalorder %s121, %s135
      %p137 = scmp.eq.s32.totalorder %s22, 0
      %p138 = por %p136, %p137
      %s140 = sadd.s32 %s139, 1
      %p143 = scmp.eq.s32.totalorder %s16, 1
      %p144 = scmp.ne.s32.totalorder %s139, %s141
      %p145 = scmp.eq.s32.totalorder %s16, 0
      %p146 = por %p144, %p145
      %p147 = scmp.ne.s32.totalorder %s139, %s141
      %p148 = scmp.eq.s32.totalorder %s21, 1
      %p149 = por %p147, %p148
      %p150 = scmp.ne.s32.totalorder %s141, %s142
      %p151 = scmp.eq.s32.totalorder %s21, 0
      %p152 = por %p150, %p151
      %p153 = scmp.ne.s32.totalorder %s141, %s142
      %p154 = scmp.eq.s32.totalorder %s22, 1
      %p155 = por %p153, %p154
      %p157 = scmp.ne.s32.totalorder %s142, %s156
      %p158 = scmp.eq.s32.totalorder %s22, 0
      %p159 = por %p157, %p158
      %s161 = sadd.s32 %s160, 1
      %p164 = scmp.eq.s32.totalorder %s16, 1
      %p165 = scmp.ne.s32.totalorder %s160, %s162
      %p166 = scmp.eq.s32.totalorder %s16, 0
      %p167 = por %p165, %p166
      %p168 = scmp.ne.s32.totalorder %s160, %s162
      %p169 = scmp.eq.s32.totalorder %s21, 1
      %p170 = por %p168, %p169
      %p171 = scmp.ne.s32.totalorder %s162, %s163
      %p172 = scmp.eq.s32.totalorder %s21, 0
      %p173 = por %p171, %p172
      %p174 = scmp.ne.s32.totalorder %s162, %s163
      %p175 = scmp.eq.s32.totalorder %s22, 1
      %p176 = por %p174, %p175
      %p178 = scmp.ne.s32.totalorder %s163, %s177
      %p179 = scmp.eq.s32.totalorder %s22, 0
      %p180 = por %p178, %p179
      %s181 = ssub.s32 %s16, %s23
      %p182 = scmp.eq.s32.totalorder %s181, 0
      %s184 = sadd.s32 %s183, 1
      %s185 = scalar_select %p182, %s183, %s184
      %p188 = pneg %p182
      %p189 = scmp.eq.s32.totalorder %s16, 1
      %p190 = por %p188, %p189
      %p191 = scmp.ne.s32.totalorder %s183, %s186
      %p192 = scmp.eq.s32.totalorder %s16, 0
      %p193 = por %p191, %p192
      %p194 = scmp.ne.s32.totalorder %s183, %s186
      %p195 = scmp.eq.s32.totalorder %s21, 1
      %p196 = por %p194, %p195
      %p197 = scmp.ne.s32.totalorder %s186, %s187
      %p198 = scmp.eq.s32.totalorder %s21, 0
      %p199 = por %p197, %p198
      %p200 = scmp.ne.s32.totalorder %s186, %s187
      %p201 = scmp.eq.s32.totalorder %s22, 1
      %p202 = por %p200, %p201
      %p204 = scmp.ne.s32.totalorder %s187, %s203
      %p205 = scmp.eq.s32.totalorder %s22, 0
      %p206 = por %p204, %p205
      %p207 = scmp.le.s32.totalorder 1, %s16
      %p208 = scmp.lt.s32.totalorder %s16, 3
      %p209 = pnand %p207, %p208
      %p210 = pneg %p209
      // Predicated region
      $region9: #{tpu_custom_call.1} parent=5 // pred_check
        _
      $region10: #{tpu_custom_call.1} parent=5 // pred_check_branch
        %212 = sbr.rel (%p209) target = $region12
      $region11: #{tpu_custom_call.1} parent=5 // pred_region
        %s213 = ssub.s32 %s16, 1
        // Predicated region
        $region13: #{tpu_custom_call.1} parent=11 // pred_check
          %p214 = pneg %p89
        $region14: #{tpu_custom_call.1} parent=11 // pred_check_branch
          %216 = sbr.rel (%p214) target = $region16
        $region15: #{tpu_custom_call.1} parent=11 // pred_region
          _
        $region16: #{tpu_custom_call.1} parent=11 // pred_fallthru
          _
        // Predicated region
        $region17: #{tpu_custom_call.1} parent=11 // pred_check
          %p217 = pneg %p110
        $region18: #{tpu_custom_call.1} parent=11 // pred_check_branch
          %219 = sbr.rel (%p217) target = $region20
        $region19: #{tpu_custom_call.1} parent=11 // pred_region
          _
        $region20: #{tpu_custom_call.1} parent=11 // pred_fallthru
          _
        // Predicated region
        $region21: #{tpu_custom_call.1} parent=11 // pred_check
          %p220 = pneg %p131
        $region22: #{tpu_custom_call.1} parent=11 // pred_check_branch
          %222 = sbr.rel (%p220) target = $region24
        $region23: #{tpu_custom_call.1} parent=11 // pred_region
          _
        $region24: #{tpu_custom_call.1} parent=11 // pred_fallthru
          _
        // Predicated region
        $region25: #{tpu_custom_call.1} parent=11 // pred_check
          %p223 = pneg %p152
        $region26: #{tpu_custom_call.1} parent=11 // pred_check_branch
          %225 = sbr.rel (%p223) target = $region28
        $region27: #{tpu_custom_call.1} parent=11 // pred_region
          _
        $region28: #{tpu_custom_call.1} parent=11 // pred_fallthru
          _
        // Predicated region
        $region29: #{tpu_custom_call.1} parent=11 // pred_check
          %p226 = pneg %p173
        $region30: #{tpu_custom_call.1} parent=11 // pred_check_branch
          %228 = sbr.rel (%p226) target = $region32
        $region31: #{tpu_custom_call.1} parent=11 // pred_region
          _
        $region32: #{tpu_custom_call.1} parent=11 // pred_fallthru
          _
      $region12: #{tpu_custom_call.1} parent=5 // pred_fallthru
        _
      %p229 = scmp.lt.s32.totalorder %s16, 2
      // Predicated region
      $region33: #{tpu_custom_call.1} parent=5 // pred_check
        %p230 = pneg %p229
      $region34: #{tpu_custom_call.1} parent=5 // pred_check_branch
        %232 = sbr.rel (%p230) target = $region36
      $region35: #{tpu_custom_call.1} parent=5 // pred_region
        // Predicated region
        $region37: #{tpu_custom_call.1} parent=35 // pred_check
          %p233 = pneg %p36
        $region38: #{tpu_custom_call.1} parent=35 // pred_check_branch
          %235 = sbr.rel (%p233) target = $region40
        $region39: #{tpu_custom_call.1} parent=35 // pred_region
          %s236 = smul.u32 4, %s16
          %p237 = scmp.lt.s32.totalorder %s236, 7
          %s238 = scalar_select %p237, %s236, 7
          %s239 = smul.addr %s238, 8
          %s240 = scalar_lea.vmem %s0, %s239
          %s241 = smul.u32 4, %s16
        $region40: #{tpu_custom_call.1} parent=35 // pred_fallthru
          _
        // Predicated region
        $region41: #{tpu_custom_call.1} parent=35 // pred_check
          %p242 = pneg %p62
        $region42: #{tpu_custom_call.1} parent=35 // pred_check_branch
          %244 = sbr.rel (%p242) target = $region44
        $region43: #{tpu_custom_call.1} parent=35 // pred_region
          %s245 = smul.u32 4, %s16
          %p246 = scmp.lt.s32.totalorder %s245, 7
          %s247 = scalar_select %p246, %s245, 7
          %s248 = smul.addr %s247, 8
          %s249 = scalar_lea.vmem %s1, %s248
          %s250 = smul.u32 4, %s16
        $region44: #{tpu_custom_call.1} parent=35 // pred_fallthru
          _
      $region36: #{tpu_custom_call.1} parent=5 // pred_fallthru
        _
      %p251 = scmp.le.s32.totalorder 1, %s16
      %p252 = scmp.lt.s32.totalorder %s16, 3
      %p253 = pnand %p251, %p252
      %p254 = pneg %p253
      // Predicated region
      $region45: #{tpu_custom_call.1} parent=5 // pred_check
        _
      $region46: #{tpu_custom_call.1} parent=5 // pred_check_branch
        %256 = sbr.rel (%p253) target = $region48
      $region47: #{tpu_custom_call.1} parent=5 // pred_region
        %s257 = ssub.s32 %s16, 1
        %s258 = smul.u32 4, %s21
        %p259 = scmp.lt.s32.totalorder %s258, 7
        %s260 = scalar_select %p259, %s258, 7
        %s261 = smul.addr %s260, 8
        %s262 = scalar_lea.vmem %s0, %s261
        %p263 = pneg %p42
        %p264 = pneg %p39
        %s265 = smul.u32 4, %s21
        %p266 = scmp.lt.s32.totalorder %s265, 7
        %s267 = scalar_select %p266, %s265, 7
        %s268 = smul.addr %s267, 8
        %s269 = scalar_lea.vmem %s1, %s268
        %p270 = pneg %p68
        %p271 = pneg %p65
        %p272 = pneg %p89
        %p273 = pneg %p86
        %p274 = pneg %p110
        %p275 = pneg %p107
        %p276 = pneg %p131
        %p277 = pneg %p128
        %p278 = pneg %p152
        %p279 = pneg %p149
        %p280 = pneg %p173
        %p281 = pneg %p170
        %p282 = pneg %p199
        %p283 = pneg %p196
        %s284 = sand.u32 %s186, 1
        %s285 = scalar_lea.sflag [#allocation3], %s284
        %s286 = sand.u32 %s186, 1
        %s287 = smul.addr %s286, 32
        %s288 = scalar_lea.vmem [#allocation2], %s287
        %s289 = smul.u32 4, %s21
        %p290 = scmp.lt.s32.totalorder %s289, 7
        %s291 = scalar_select %p290, %s289, 7
        %s292 = smul.addr %s291, 8
        %s293 = scalar_lea.vmem %s0, %s292
        %s294 = smul.u32 4, %s21
        %s295 = smul.u32 4, %s21
        %p296 = scmp.lt.s32.totalorder %s295, 7
        %s297 = scalar_select %p296, %s295, 7
        %s298 = smul.addr %s297, 8
        %s299 = scalar_lea.vmem %s1, %s298
        %s300 = smul.u32 4, %s21
        %s301 = smul.u32 4, %s21
        %v303 = vld [vmem:[%s293] sm:$0xff]
        %v304 = vld [vmem:[%s293 + $0x8] sm:$0xff]
        %v305 = vld [vmem:[%s293 + $0x10] sm:$0xff]
        %v306 = vld [vmem:[%s293 + $0x18] sm:$0xff]
        %v307 = vld [vmem:[%s299] sm:$0xff]
        %v308 = vld [vmem:[%s299 + $0x8] sm:$0xff]
        %v309 = vld [vmem:[%s299 + $0x10] sm:$0xff]
        %v310 = vld [vmem:[%s299 + $0x18] sm:$0xff]
        %v311 = vadd.f32 %v303, %v307
        %v312 = vadd.f32 %v304, %v308
        %v313 = vadd.f32 %v305, %v309
        %v314 = vadd.f32 %v306, %v310
        %v315 = vpack.c.bf16 %v312, %v311
        %v316 = vpack.c.bf16 %v314, %v313
        %v317 = vld [vmem:[%s6] sm:$0xff]
        %v318 = vld [vmem:[%s2] sm:$0xf]
        %v319 = vld [vmem:[%s2 + $0x4] sm:$0xf]
        %v320 = vld [vmem:[%s2 + $0x8] sm:$0xf]
        %v321 = vld [vmem:[%s2 + $0xc] sm:$0xf]
        %v322 = vld [vmem:[%s2 + $0x10] sm:$0xf]
        %v323 = vld [vmem:[%s2 + $0x14] sm:$0xf]
        %v324 = vld [vmem:[%s2 + $0x18] sm:$0xf]
        %v325 = vld [vmem:[%s2 + $0x1c] sm:$0xf]
        %v326 = vld [vmem:[%s2 + $0x20] sm:$0xf]
        %v327 = vld [vmem:[%s2 + $0x24] sm:$0xf]
        %v328 = vld [vmem:[%s2 + $0x28] sm:$0xf]
        %v329 = vld [vmem:[%s2 + $0x2c] sm:$0xf]
        %v330 = vld [vmem:[%s2 + $0x30] sm:$0xf]
        %v331 = vld [vmem:[%s2 + $0x34] sm:$0xf]
        %v332 = vld [vmem:[%s2 + $0x38] sm:$0xf]
        %v333 = vld [vmem:[%s2 + $0x3c] sm:$0xf]
        %v334 = vlaneseq
        %v335 = vshrl.u32 %v334, 7
        %v336 = vsub.s32 0, %v335
        %v337 = vrot.slane %v317, %v336
        %v354 = vunpack.c.l.b16 %v318
        %v355 = vunpack.c.l.b16 %v319
        %v356 = vunpack.c.l.b16 %v320
        %v357 = vunpack.c.l.b16 %v321
        %v358 = vunpack.c.l.b16 %v322
        %v359 = vunpack.c.l.b16 %v323
        %v360 = vunpack.c.l.b16 %v324
        %v361 = vunpack.c.l.b16 %v325
        %v362 = vunpack.c.l.b16 %v326
        %v363 = vunpack.c.l.b16 %v327
        %v364 = vunpack.c.l.b16 %v328
        %v365 = vunpack.c.l.b16 %v329
        %v366 = vunpack.c.l.b16 %v330
        %v367 = vunpack.c.l.b16 %v331
        %v368 = vunpack.c.l.b16 %v332
        %v369 = vunpack.c.l.b16 %v333
        %v370 = vpack.c.b16 %v355, %v354
        %v371 = vpack.c.b16 %v357, %v356
        %v372 = vpack.c.b16 %v359, %v358
        %v373 = vpack.c.b16 %v361, %v360
        %v374 = vpack.c.b16 %v363, %v362
        %v375 = vpack.c.b16 %v365, %v364
        %v376 = vpack.c.b16 %v367, %v366
        %v377 = vpack.c.b16 %v369, %v368
        %386 = vmatprep.subr.bf16.mxu0 0
        %387 = vmatpush1.bf16.msra.mxu0 %v370
        %388 = vmatprep.subr.bf16.mxu0 0
        %389 = vmatpush1.bf16.msra.mxu0 %v371
        %390 = vmatprep.subr.bf16.mxu0 0
        %391 = vmatpush1.bf16.msra.mxu0 %v372
        %392 = vmatprep.subr.bf16.mxu0 0
        %393 = vmatpush1.bf16.msra.mxu0 %v373
        %394 = vmatprep.subr.bf16.mxu0 0
        %395 = vmatpush1.bf16.msra.mxu0 %v374
        %396 = vmatprep.subr.bf16.mxu0 0
        %397 = vmatpush1.bf16.msra.mxu0 %v375
        %398 = vmatprep.subr.bf16.mxu0 0
        %399 = vmatpush1.bf16.msra.mxu0 %v376
        %400 = vmatprep.subr.bf16.mxu0 0
        %401 = vmatpush1.bf16.msra.mxu0 %v377
        %402 = vmatprep.subr.bf16.mxu0 0
        %403 = vmatpush1.bf16.msra.mxu0 0
        %404 = vmatprep.subr.bf16.mxu0 0
        %405 = vmatpush1.bf16.msra.mxu0 0
        %406 = vmatprep.subr.bf16.mxu0 0
        %407 = vmatpush1.bf16.msra.mxu0 0
        %408 = vmatprep.subr.bf16.mxu0 0
        %409 = vmatpush1.bf16.msra.mxu0 0
        %410 = vmatprep.subr.bf16.mxu0 0
        %411 = vmatpush1.bf16.msra.mxu0 0
        %412 = vmatprep.subr.bf16.mxu0 0
        %413 = vmatpush1.bf16.msra.mxu0 0
        %414 = vmatprep.subr.bf16.mxu0 0
        %415 = vmatpush1.bf16.msra.mxu0 0
        %416 = vmatprep.subr.bf16.mxu0 0
        %417 = vmatpush1.bf16.msra.mxu0 0
        %418 = vmatprep.mubr.bf16.mxu0 0
        %419 = vmatmul.mubr.bf16.gmra.mrb[0].mxu0 %v315
        %v420 = vpop.f32.mrb[0].mxu0
        %v421 = vadd.f32 %v337, %v420
        %v422 = vpop.f32.mrb[0].mxu0
        %v423 = vpop.f32.mrb[0].mxu0
        %v424 = vadd.f32 %v337, %v423
        %v425 = vpop.f32.mrb[0].mxu0
        %426 = vmatprep.mubr.bf16.mxu0 0
        %427 = vmatmul.mubr.bf16.gmra.mrb[0].mxu0 %v316
        %v428 = vpop.f32.mrb[0].mxu0
        %v429 = vadd.f32 %v337, %v428
        %v430 = vpop.f32.mrb[0].mxu0
        %v431 = vpop.f32.mrb[0].mxu0
        %v432 = vadd.f32 %v337, %v431
        %v433 = vpop.f32.mrb[0].mxu0
        %434 = vdwg.mxu0
        %v435 = vmax.f32 %v421, 0.0
        %v436 = vmax.f32 %v424, 0.0
        %v437 = vmax.f32 %v429, 0.0
        %v438 = vmax.f32 %v432, 0.0
        %v439 = vpack.c.bf16 %v436, %v435
        %v440 = vpack.c.bf16 %v438, %v437
        %v441 = vld [vmem:[%s3] sm:$0xf]
        %v442 = vld [vmem:[%s3 + $0x4] sm:$0xf]
        %v443 = vld [vmem:[%s3 + $0x8] sm:$0xf]
        %v444 = vld [vmem:[%s3 + $0xc] sm:$0xf]
        %v445 = vlaneseq
        %v446 = vshrl.u32 %v445, 7
        %v447 = vsub.s32 1, %v446
        %v448 = vrot.slane %v317, %v447
        %v453 = vunpack.c.l.b16 %v441
        %v454 = vunpack.c.l.b16 %v442
        %v455 = vunpack.c.l.b16 %v443
        %v456 = vunpack.c.l.b16 %v444
        %v457 = vpack.c.b16 %v454, %v453
        %v458 = vpack.c.b16 %v456, %v455
        %vm461 = vcmask 261120
        %v463 = vsel %vm461, %v439, 0
        %v466 = vsel %vm461, %v440, 0
        %468 = vmatprep.subr.bf16.mxu0 0
        %469 = vmatpush1.bf16.msra.mxu0 %v457
        %470 = vmatprep.subr.bf16.mxu0 0
        %471 = vmatpush1.bf16.msra.mxu0 %v458
        %472 = vmatprep.subr.bf16.mxu0 0
        %473 = vmatpush1.bf16.msra.mxu0 0
        %474 = vmatprep.subr.bf16.mxu0 0
        %475 = vmatpush1.bf16.msra.mxu0 0
        %476 = vmatprep.subr.bf16.mxu0 0
        %477 = vmatpush1.bf16.msra.mxu0 0
        %478 = vmatprep.subr.bf16.mxu0 0
        %479 = vmatpush1.bf16.msra.mxu0 0
        %480 = vmatprep.subr.bf16.mxu0 0
        %481 = vmatpush1.bf16.msra.mxu0 0
        %482 = vmatprep.subr.bf16.mxu0 0
        %483 = vmatpush1.bf16.msra.mxu0 0
        %484 = vmatprep.subr.bf16.mxu0 0
        %485 = vmatpush1.bf16.msra.mxu0 0
        %486 = vmatprep.subr.bf16.mxu0 0
        %487 = vmatpush1.bf16.msra.mxu0 0
        %488 = vmatprep.subr.bf16.mxu0 0
        %489 = vmatpush1.bf16.msra.mxu0 0
        %490 = vmatprep.subr.bf16.mxu0 0
        %491 = vmatpush1.bf16.msra.mxu0 0
        %492 = vmatprep.subr.bf16.mxu0 0
        %493 = vmatpush1.bf16.msra.mxu0 0
        %494 = vmatprep.subr.bf16.mxu0 0
        %495 = vmatpush1.bf16.msra.mxu0 0
        %496 = vmatprep.subr.bf16.mxu0 0
        %497 = vmatpush1.bf16.msra.mxu0 0
        %498 = vmatprep.subr.bf16.mxu0 0
        %499 = vmatpush1.bf16.msra.mxu0 0
        %500 = vmatprep.mubr.bf16.mxu0 0
        %501 = vmatmul.mubr.bf16.gmra.mrb[0].mxu0 %v463
        %v502 = vpop.f32.mrb[0].mxu0
        %v503 = vadd.f32 %v448, %v502
        %v504 = vpop.f32.mrb[0].mxu0
        %v505 = vpop.f32.mrb[0].mxu0
        %v506 = vadd.f32 %v448, %v505
        %v507 = vpop.f32.mrb[0].mxu0
        %508 = vmatprep.mubr.bf16.mxu0 0
        %509 = vmatmul.mubr.bf16.gmra.mrb[0].mxu0 %v466
        %v510 = vpop.f32.mrb[0].mxu0
        %v511 = vadd.f32 %v448, %v510
        %v512 = vpop.f32.mrb[0].mxu0
        %v513 = vpop.f32.mrb[0].mxu0
        %v514 = vadd.f32 %v448, %v513
        %v515 = vpop.f32.mrb[0].mxu0
        %516 = vdwg.mxu0
        %517 = vrot.lane.b32.xlu0 %v311, 1
        %v518 = vpop.permute.xlu0 %517
        %519 = vrot.lane.b32.xlu0 %v312, 1
        %v520 = vpop.permute.xlu0 %519
        %521 = vrot.lane.b32.xlu0 %v313, 1
        %v522 = vpop.permute.xlu0 %521
        %523 = vrot.lane.b32.xlu0 %v314, 1
        %v524 = vpop.permute.xlu0 %523
        %v525 = vlaneseq
        %v526 = vshrl.u32 %v525, 7
        %v527 = vsub.s32 2, %v526
        %v528 = vrot.slane %v317, %v527
        %v529 = vmul.f32 %v528, %v518
        %v530 = vmul.f32 %v528, %v520
        %v531 = vmul.f32 %v528, %v522
        %v532 = vmul.f32 %v528, %v524
        %v533 = vlaneseq
        %v534 = vshrl.u32 %v533, 7
        %v535 = vsub.s32 3, %v534
        %v536 = vrot.slane %v317, %v535
        %v537 = vmul.f32 %v536, %v311
        %v538 = vmul.f32 %v536, %v312
        %v539 = vmul.f32 %v536, %v313
        %v540 = vmul.f32 %v536, %v314
        %v541 = vadd.f32 %v529, %v537
        %v542 = vadd.f32 %v530, %v538
        %v543 = vadd.f32 %v531, %v539
        %v544 = vadd.f32 %v532, %v540
        %545 = vrot.lane.b32.xlu0 %v311, 127
        %v546 = vpop.permute.xlu0 %545
        %547 = vrot.lane.b32.xlu0 %v312, 127
        %v548 = vpop.permute.xlu0 %547
        %549 = vrot.lane.b32.xlu0 %v313, 127
        %v550 = vpop.permute.xlu0 %549
        %551 = vrot.lane.b32.xlu0 %v314, 127
        %v552 = vpop.permute.xlu0 %551
        %v553 = vlaneseq
        %v554 = vshrl.u32 %v553, 7
        %v555 = vsub.s32 4, %v554
        %v556 = vrot.slane %v317, %v555
        %v557 = vmul.f32 %v556, %v546
        %v558 = vmul.f32 %v556, %v548
        %v559 = vmul.f32 %v556, %v550
        %v560 = vmul.f32 %v556, %v552
        %v561 = vadd.f32 %v541, %v557
        %v562 = vadd.f32 %v542, %v558
        %v563 = vadd.f32 %v543, %v559
        %v564 = vadd.f32 %v544, %v560
        %v565 = vlaneseq
        %v566 = vshrl.u32 %v565, 7
        %v567 = vsub.s32 5, %v566
        %v568 = vrot.slane %v317, %v567
        %v569 = vadd.f32 %v561, %v568
        %v570 = vadd.f32 %v562, %v568
        %v571 = vadd.f32 %v563, %v568
        %v572 = vadd.f32 %v564, %v568
        %v573 = vadd.f32 %v503, %v569
        %v574 = vadd.f32 %v506, %v570
        %v575 = vadd.f32 %v511, %v571
        %v576 = vadd.f32 %v514, %v572
        %v577 = vpack.c.bf16 %v574, %v573
        %v578 = vpack.c.bf16 %v576, %v575
        %v579 = vld [vmem:[%s4] sm:$0xf]
        %v580 = vld [vmem:[%s4 + $0x4] sm:$0xf]
        %v581 = vld [vmem:[%s4 + $0x8] sm:$0xf]
        %v582 = vld [vmem:[%s4 + $0xc] sm:$0xf]
        %v583 = vld [vmem:[%s4 + $0x10] sm:$0xf]
        %v584 = vld [vmem:[%s4 + $0x14] sm:$0xf]
        %v585 = vld [vmem:[%s4 + $0x18] sm:$0xf]
        %v586 = vld [vmem:[%s4 + $0x1c] sm:$0xf]
        %v587 = vld [vmem:[%s4 + $0x20] sm:$0xf]
        %v588 = vld [vmem:[%s4 + $0x24] sm:$0xf]
        %v589 = vld [vmem:[%s4 + $0x28] sm:$0xf]
        %v590 = vld [vmem:[%s4 + $0x2c] sm:$0xf]
        %v591 = vld [vmem:[%s4 + $0x30] sm:$0xf]
        %v592 = vld [vmem:[%s4 + $0x34] sm:$0xf]
        %v593 = vld [vmem:[%s4 + $0x38] sm:$0xf]
        %v594 = vld [vmem:[%s4 + $0x3c] sm:$0xf]
        %v595 = vlaneseq
        %v596 = vshrl.u32 %v595, 7
        %v597 = vsub.s32 6, %v596
        %v598 = vrot.slane %v317, %v597
        %v615 = vunpack.c.l.b16 %v579
        %v616 = vunpack.c.l.b16 %v580
        %v617 = vunpack.c.l.b16 %v581
        %v618 = vunpack.c.l.b16 %v582
        %v619 = vunpack.c.l.b16 %v583
        %v620 = vunpack.c.l.b16 %v584
        %v621 = vunpack.c.l.b16 %v585
        %v622 = vunpack.c.l.b16 %v586
        %v623 = vunpack.c.l.b16 %v587
        %v624 = vunpack.c.l.b16 %v588
        %v625 = vunpack.c.l.b16 %v589
        %v626 = vunpack.c.l.b16 %v590
        %v627 = vunpack.c.l.b16 %v591
        %v628 = vunpack.c.l.b16 %v592
        %v629 = vunpack.c.l.b16 %v593
        %v630 = vunpack.c.l.b16 %v594
        %v631 = vpack.c.b16 %v616, %v615
        %v632 = vpack.c.b16 %v618, %v617
        %v633 = vpack.c.b16 %v620, %v619
        %v634 = vpack.c.b16 %v622, %v621
        %v635 = vpack.c.b16 %v624, %v623
        %v636 = vpack.c.b16 %v626, %v625
        %v637 = vpack.c.b16 %v628, %v627
        %v638 = vpack.c.b16 %v630, %v629
        %647 = vmatprep.subr.bf16.mxu0 0
        %648 = vmatpush1.bf16.msra.mxu0 %v631
        %649 = vmatprep.subr.bf16.mxu0 0
        %650 = vmatpush1.bf16.msra.mxu0 %v632
        %651 = vmatprep.subr.bf16.mxu0 0
        %652 = vmatpush1.bf16.msra.mxu0 %v633
        %653 = vmatprep.subr.bf16.mxu0 0
        %654 = vmatpush1.bf16.msra.mxu0 %v634
        %655 = vmatprep.subr.bf16.mxu0 0
        %656 = vmatpush1.bf16.msra.mxu0 %v635
        %657 = vmatprep.subr.bf16.mxu0 0
        %658 = vmatpush1.bf16.msra.mxu0 %v636
        %659 = vmatprep.subr.bf16.mxu0 0
        %660 = vmatpush1.bf16.msra.mxu0 %v637
        %661 = vmatprep.subr.bf16.mxu0 0
        %662 = vmatpush1.bf16.msra.mxu0 %v638
        %663 = vmatprep.subr.bf16.mxu0 0
        %664 = vmatpush1.bf16.msra.mxu0 0
        %665 = vmatprep.subr.bf16.mxu0 0
        %666 = vmatpush1.bf16.msra.mxu0 0
        %667 = vmatprep.subr.bf16.mxu0 0
        %668 = vmatpush1.bf16.msra.mxu0 0
        %669 = vmatprep.subr.bf16.mxu0 0
        %670 = vmatpush1.bf16.msra.mxu0 0
        %671 = vmatprep.subr.bf16.mxu0 0
        %672 = vmatpush1.bf16.msra.mxu0 0
        %673 = vmatprep.subr.bf16.mxu0 0
        %674 = vmatpush1.bf16.msra.mxu0 0
        %675 = vmatprep.subr.bf16.mxu0 0
        %676 = vmatpush1.bf16.msra.mxu0 0
        %677 = vmatprep.subr.bf16.mxu0 0
        %678 = vmatpush1.bf16.msra.mxu0 0
        %679 = vmatprep.mubr.bf16.mxu0 0
        %680 = vmatmul.mubr.bf16.gmra.mrb[0].mxu0 %v577
        %v681 = vpop.f32.mrb[0].mxu0
        %v682 = vadd.f32 %v598, %v681
        %v683 = vpop.f32.mrb[0].mxu0
        %v684 = vpop.f32.mrb[0].mxu0
        %v685 = vadd.f32 %v598, %v684
        %v686 = vpop.f32.mrb[0].mxu0
        %687 = vmatprep.mubr.bf16.mxu0 0
        %688 = vmatmul.mubr.bf16.gmra.mrb[0].mxu0 %v578
        %v689 = vpop.f32.mrb[0].mxu0
        %v690 = vadd.f32 %v598, %v689
        %v691 = vpop.f32.mrb[0].mxu0
        %v692 = vpop.f32.mrb[0].mxu0
        %v693 = vadd.f32 %v598, %v692
        %v694 = vpop.f32.mrb[0].mxu0
        %695 = vdwg.mxu0
        %v696 = vmax.f32 %v682, 0.0
        %v697 = vmax.f32 %v685, 0.0
        %v698 = vmax.f32 %v690, 0.0
        %v699 = vmax.f32 %v693, 0.0
        %v700 = vpack.c.bf16 %v697, %v696
        %v701 = vpack.c.bf16 %v699, %v698
        %v702 = vld [vmem:[%s5] sm:$0xf]
        %v703 = vlaneseq
        %v704 = vshrl.u32 %v703, 7
        %v705 = vsub.s32 7, %v704
        %v706 = vrot.slane %v317, %v705
        %vm707 = vcmask 64512
        %v709 = vsel %vm707, %v700, 0
        %v712 = vsel %vm707, %v701, 0
        %vm714 = vcmask 1043456
        %v716 = vsel %vm714, %v702, 0
        %718 = vmatprep.subr.bf16.mxu0 0
        %719 = vmatpush1.bf16.msra.mxu0 %v716
        %720 = vmatprep.subr.bf16.mxu0 0
        %721 = vmatpush1.bf16.msra.mxu0 0
        %722 = vmatprep.subr.bf16.mxu0 0
        %723 = vmatpush1.bf16.msra.mxu0 0
        %724 = vmatprep.subr.bf16.mxu0 0
        %725 = vmatpush1.bf16.msra.mxu0 0
        %726 = vmatprep.subr.bf16.mxu0 0
        %727 = vmatpush1.bf16.msra.mxu0 0
        %728 = vmatprep.subr.bf16.mxu0 0
        %729 = vmatpush1.bf16.msra.mxu0 0
        %730 = vmatprep.subr.bf16.mxu0 0
        %731 = vmatpush1.bf16.msra.mxu0 0
        %732 = vmatprep.subr.bf16.mxu0 0
        %733 = vmatpush1.bf16.msra.mxu0 0
        %734 = vmatprep.subr.bf16.mxu0 0
        %735 = vmatpush1.bf16.msra.mxu0 0
        %736 = vmatprep.subr.bf16.mxu0 0
        %737 = vmatpush1.bf16.msra.mxu0 0
        %738 = vmatprep.subr.bf16.mxu0 0
        %739 = vmatpush1.bf16.msra.mxu0 0
        %740 = vmatprep.subr.bf16.mxu0 0
        %741 = vmatpush1.bf16.msra.mxu0 0
        %742 = vmatprep.subr.bf16.mxu0 0
        %743 = vmatpush1.bf16.msra.mxu0 0
        %744 = vmatprep.subr.bf16.mxu0 0
        %745 = vmatpush1.bf16.msra.mxu0 0
        %746 = vmatprep.subr.bf16.mxu0 0
        %747 = vmatpush1.bf16.msra.mxu0 0
        %748 = vmatprep.subr.bf16.mxu0 0
        %749 = vmatpush1.bf16.msra.mxu0 0
        %750 = vmatprep.mubr.bf16.mxu0 0
        %751 = vmatmul.mubr.bf16.gmra.mrb[0].mxu0 %v709
        %v752 = vpop.f32.mrb[0].mxu0
        %v753 = vadd.f32 %v706, %v752
        %v754 = vpop.f32.mrb[0].mxu0
        %v755 = vpop.f32.mrb[0].mxu0
        %v756 = vadd.f32 %v706, %v755
        %v757 = vpop.f32.mrb[0].mxu0
        %758 = vmatprep.mubr.bf16.mxu0 0
        %759 = vmatmul.mubr.bf16.gmra.mrb[0].mxu0 %v712
        %v760 = vpop.f32.mrb[0].mxu0
        %v761 = vadd.f32 %v706, %v760
        %v762 = vpop.f32.mrb[0].mxu0
        %v763 = vpop.f32.mrb[0].mxu0
        %v764 = vadd.f32 %v706, %v763
        %v765 = vpop.f32.mrb[0].mxu0
        %766 = vdwg.mxu0
        %v767 = vxor.u32 %v753, 2147483648
        %v768 = vxor.u32 %v756, 2147483648
        %v769 = vxor.u32 %v761, 2147483648
        %v770 = vxor.u32 %v764, 2147483648
        %v771 = vmul.f32 %v767, 1.442695
        %v772 = vpow.pop %v771
        %v773 = vmul.f32 %v768, 1.442695
        %v774 = vpow.pop %v773
        %v775 = vmul.f32 %v769, 1.442695
        %v776 = vpow.pop %v775
        %v777 = vmul.f32 %v770, 1.442695
        %v778 = vpow.pop %v777
        %v779 = vadd.f32 %v772, 1.0
        %v780 = vadd.f32 %v774, 1.0
        %v781 = vadd.f32 %v776, 1.0
        %v782 = vadd.f32 %v778, 1.0
        %v783 = vrcp.pop %v779
        %v784 = vmul.f32 1.0, %v783
        %v785 = vrcp.pop %v780
        %v786 = vmul.f32 1.0, %v785
        %v787 = vrcp.pop %v781
        %v788 = vmul.f32 1.0, %v787
        %v789 = vrcp.pop %v782
        %v790 = vmul.f32 1.0, %v789
        %v791 = vsub.f32 %v303, %v307
        %v792 = vsub.f32 %v304, %v308
        %v793 = vsub.f32 %v305, %v309
        %v794 = vsub.f32 %v306, %v310
        %v795 = vmul.f32 %v791, %v784
        %v796 = vmul.f32 %v792, %v786
        %v797 = vmul.f32 %v793, %v788
        %v798 = vmul.f32 %v794, %v790
        %v799 = vadd.f32 %v307, %v795
        %v800 = vadd.f32 %v308, %v796
        %v801 = vadd.f32 %v309, %v797
        %v802 = vadd.f32 %v310, %v798
        %v803 = vmul.f32 %v799, 2.0
        %v804 = vmul.f32 %v800, 2.0
        %v805 = vmul.f32 %v801, 2.0
        %v806 = vmul.f32 %v802, 2.0
        %807 = vst [vmem:[%s288] sm:$0xff] %v803
        %808 = vst [vmem:[%s288 + $0x8] sm:$0xff] %v804
        %809 = vst [vmem:[%s288 + $0x10] sm:$0xff] %v805
        %810 = vst [vmem:[%s288 + $0x18] sm:$0xff] %v806
        %s811 = sand.u32 %s186, 1
        %s812 = scalar_lea.sflag [#allocation3], %s811
        %s813 = sand.u32 %s186, 1
        %s814 = smul.addr %s813, 32
        %s815 = scalar_lea.vmem [#allocation2], %s814
        // Predicated region
        $region49: #{tpu_custom_call.1} parent=47 // pred_check
          %p816 = pneg %p196
        $region50: #{tpu_custom_call.1} parent=47 // pred_check_branch
          %818 = sbr.rel (%p816) target = $region52
        $region51: #{tpu_custom_call.1} parent=47 // pred_region
          %s819 = smul.u32 4, %s21
          %s821 = ssub.s32 512, 512
          %822 = vsyncadd %s812, %s821
          %s823 = smul.addr %s819, 128
          %s824 = scalar_lea.hbm %s7, %s823
          %s825 = sshll.u32 %s815, 4
          %s826 = int_to_ptr.vmem [resolvable:$true] %s825
          %831 = dma.vmem_to_hbm [thread:$0]  %s826, 512, %s824, %s812, 128, 128, 8
        $region52: #{tpu_custom_call.1} parent=47 // pred_fallthru
          _
      $region48: #{tpu_custom_call.1} parent=5 // pred_fallthru
        _
      %p832 = scmp.le.s32.totalorder 2, %s16
      // Predicated region
      $region53: #{tpu_custom_call.1} parent=5 // pred_check
        %p833 = pneg %p832
      $region54: #{tpu_custom_call.1} parent=5 // pred_check_branch
        %835 = sbr.rel (%p833) target = $region56
      $region55: #{tpu_custom_call.1} parent=5 // pred_region
        %s836 = ssub.s32 %s16, 2
        // Predicated region
        $region57: #{tpu_custom_call.1} parent=55 // pred_check
          %p837 = pneg %p202
        $region58: #{tpu_custom_call.1} parent=55 // pred_check_branch
          %839 = sbr.rel (%p837) target = $region60
        $region59: #{tpu_custom_call.1} parent=55 // pred_region
          %s840 = sand.u32 %s187, 1
          %s841 = scalar_lea.sflag [#allocation3], %s840
          %s842 = sand.u32 %s187, 1
          %s843 = smul.addr %s842, 32
          %s844 = scalar_lea.vmem [#allocation2], %s843
          %845 = dma.done %s841, 512
        $region60: #{tpu_custom_call.1} parent=55 // pred_fallthru
          _
      $region56: #{tpu_custom_call.1} parent=5 // pred_fallthru
        _
    $region6: #{tpu_custom_call.1} parent=1 // loop_footer
      %s20 = sadd.s32 1, %s16
    $region7: #{tpu_custom_call.1} parent=1 // loop_footer_branch
      %15 = sbr.rel target = $region3
    $region8: #{tpu_custom_call.1} parent=1 // loop_exit
      _
    %846 = vsyncpa [#allocation3], 1
    %s847 = scalar_lea.sflag [#allocation3], 1
    %848 = vsyncpa %s847, 1

</llo_original>
